<compile_context>
chip_gen: v7x
topology: tpu7x:2x2x1
jax: 0.10.0
libtpu: 0.0.40
codegen_flags: <defaults>
</compile_context>

<pallas_src>
import jax
import jax.numpy as jnp
from jax import lax
from jax.experimental import pallas as pl
from jax.experimental.pallas import tpu as pltpu

EPS = 1e-5


def _same_pad_conv(L, k, s):
    out_dim = (L + s - 1) // s
    p = max(0, (out_dim - 1) * s + k - L)
    return out_dim, p // 2, p - p // 2


def _same_pad_maxpool(L, k):
    s = k
    out_dim = (L + s - 1) // s
    if out_dim % 2 != 0:
        out_dim += 1
    p = max(0, (out_dim - 1) * s + k - L)
    return out_dim, p // 2, p - p // 2


def basic_block_pallas(x, params, *, kernel_size, stride, groups,
                       downsample, use_bn, use_do, is_first_block):
    # TODO(synk): dropout (do1/do2) treated as eval-mode identity.
    N, C_in, L = x.shape
    w1, b1, w2, b2 = params["w1"], params["b1"], params["w2"], params["b2"]
    g1, be1, g2, be2 = (params["gamma1"], params["beta1"],
                        params["gamma2"], params["beta2"])
    C_out = w1.shape[0]
    K = kernel_size
    s = stride if downsample else 1
    C_in_g = C_in // groups
    C_out_g = C_out // groups
    apply_ln1 = (not is_first_block) and use_bn

    # static SAME-padding geometry (mirrors MyConv1dPadSame / MyMaxPool1dPadSame)
    L1, padl1, padr1 = _same_pad_conv(L, K, s)
    L2, padl2, padr2 = _same_pad_conv(L1, K, 1)          # L2 == L1
    if downsample:
        L_id, padl_id, _ = _same_pad_maxpool(L, s)
    else:
        L_id, padl_id = L, 0
    ch1 = (C_out - C_in) // 2
    ch2 = C_out - C_in - ch1

    # Unified zero padding covering both conv1's and the max-pool's SAME pads,
    # then a phase split so stride-s accesses become contiguous lane slices:
    #   x_phase[n, r*C_in + c, j] == x_padded[n, c, j*s + r]
    PL = max(padl1, padl_id)
    delta1 = PL - padl1
    delta_id = PL - padl_id
    Lq = max(L1 + (delta1 + K - 1) // s, -(-(PL + L) // s))
    if downsample:
        Lq = max(Lq, L_id + (delta_id + s - 1) // s)
    Ltot = Lq * s

    # batch blocking: several batch elements per grid step
    NB = max(1, min(4, N // 2)) if N >= 2 else 1
    Np = -(-N // NB) * NB

    xp = jnp.pad(x, ((0, Np - N), (0, 0), (PL, Ltot - PL - L)))
    xp = (xp.reshape(Np, C_in, Lq, s)
            .transpose(0, 3, 1, 2)
            .reshape(Np, s * C_in, Lq))

    # weights pre-reshaped so each group's conv is one (C_out_g, K*C_in_g) LHS
    w1_r = jnp.transpose(w1, (0, 2, 1)).reshape(C_out, K * C_in_g).astype(jnp.bfloat16)
    w2_r = jnp.transpose(w2, (0, 2, 1)).reshape(C_out, K * C_out_g).astype(jnp.bfloat16)
    b1_r, b2_r = b1.reshape(C_out, 1), b2.reshape(C_out, 1)
    g1_r, be1_r = g1.reshape(C_in, 1), be1.reshape(C_in, 1)
    g2_r, be2_r = g2.reshape(C_out, 1), be2.reshape(C_out, 1)

    # tap geometry: padded column (l*s + k + delta) == phase r, lane l + q
    taps1 = [((k + delta1) // s, (k + delta1) % s) for k in range(K)]
    pool_taps = [((j + delta_id) // s, (j + delta_id) % s) for j in range(s)]

    def kernel(x_ref, w1_ref, b1_ref, w2_ref, b2_ref,
               g1_ref, be1_ref, g2_ref, be2_ref, o_ref):
        # per-phase validity masks (SAME-pad columns must stay zero through LN1)
        if apply_ln1:
            masks = []
            for r in range(s):
                pos = lax.broadcasted_iota(jnp.int32, (C_in, Lq), 1) * s + r
                masks.append(jnp.logical_and(pos >= PL, pos < PL + L))

        for b in range(NB):
            xb = x_ref[b]                                       # (s*C_in, Lq) f32
            raw = [xb[r * C_in:(r + 1) * C_in, :] for r in range(s)]

            # ----- main branch: LN1 (channels-first) + ReLU, per phase -----
            acts = []
            for r in range(s):
                a = raw[r]
                if apply_ln1:
                    mu = jnp.mean(a, axis=0, keepdims=True)
                    var = jnp.mean(jnp.square(a - mu), axis=0, keepdims=True)
                    a = (a - mu) * lax.rsqrt(var + EPS)
                    a = a * g1_ref[...] + be1_ref[...]
                    a = jnp.where(masks[r], a, 0.0)
                acts.append(jnp.maximum(a, 0.0))

            # ----- conv1: one im2col MXU matmul per group (stride via phases) ----
            outs = []
            for g in range(groups):
                cols = [acts[r][g * C_in_g:(g + 1) * C_in_g, q:q + L1]
                        for (q, r) in taps1]
                col = cols[0] if K == 1 else jnp.concatenate(cols, axis=0)
                wg = w1_ref[g * C_out_g:(g + 1) * C_out_g, :]
                outs.append(jnp.dot(wg, col.astype(jnp.bfloat16),
                                    preferred_element_type=jnp.float32))
            h = outs[0] if groups == 1 else jnp.concatenate(outs, axis=0)
            h = h + b1_ref[...]                                 # (C_out, L1) f32

            # ----- LN2 + ReLU -----
            if use_bn:
                mu = jnp.mean(h, axis=0, keepdims=True)
                var = jnp.mean(jnp.square(h - mu), axis=0, keepdims=True)
                h = (h - mu) * lax.rsqrt(var + EPS)
                h = h * g2_ref[...] + be2_ref[...]
            h = jnp.maximum(h, 0.0)

            # ----- conv2 (stride 1): SAME pad built as a value, one dot/group ----
            pieces = []
            if padl2 > 0:
                pieces.append(jnp.zeros((C_out, padl2), jnp.float32))
            pieces.append(h)
            if padr2 > 0:
                pieces.append(jnp.zeros((C_out, padr2), jnp.float32))
            hp = pieces[0] if len(pieces) == 1 else jnp.concatenate(pieces, axis=1)
            outs = []
            for g in range(groups):
                cols = [hp[g * C_out_g:(g + 1) * C_out_g, k:k + L2]
                        for k in range(K)]
                col = cols[0] if K == 1 else jnp.concatenate(cols, axis=0)
                wg = w2_ref[g * C_out_g:(g + 1) * C_out_g, :]
                outs.append(jnp.dot(wg, col.astype(jnp.bfloat16),
                                    preferred_element_type=jnp.float32))
            out2 = outs[0] if groups == 1 else jnp.concatenate(outs, axis=0)
            out2 = out2 + b2_ref[...]                           # (C_out, L2) f32

            # ----- identity branch (zero-padded SAME max-pool, like reference) ---
            if downsample:
                ident = None
                for (q, r) in pool_taps:
                    piece = raw[r][:, q:q + L_id]
                    ident = piece if ident is None else jnp.maximum(ident, piece)
            else:
                ident = raw[0][:, PL:PL + L]
            if C_out != C_in:                                   # zero-pad channels
                parts = []
                if ch1 > 0:
                    parts.append(jnp.zeros((ch1, L_id), jnp.float32))
                parts.append(ident)
                if ch2 > 0:
                    parts.append(jnp.zeros((ch2, L_id), jnp.float32))
                ident = jnp.concatenate(parts, axis=0)
            if L2 != L_id:                                      # zero-pad out length
                out2 = jnp.concatenate(
                    [out2, jnp.zeros((C_out, L_id - L2), jnp.float32)], axis=1)

            o_ref[b] = (out2 + ident).astype(o_ref.dtype)       # lane-dense (C_out, L_id)

    grid = (Np // NB,)
    in_specs = [
        pl.BlockSpec((NB, s * C_in, Lq), lambda n: (n, 0, 0)),      # x (phase-split)
        pl.BlockSpec((C_out, K * C_in_g), lambda n: (0, 0)),        # w1
        pl.BlockSpec((C_out, 1), lambda n: (0, 0)),                 # b1
        pl.BlockSpec((C_out, K * C_out_g), lambda n: (0, 0)),       # w2
        pl.BlockSpec((C_out, 1), lambda n: (0, 0)),                 # b2
        pl.BlockSpec((C_in, 1), lambda n: (0, 0)),                  # gamma1
        pl.BlockSpec((C_in, 1), lambda n: (0, 0)),                  # beta1
        pl.BlockSpec((C_out, 1), lambda n: (0, 0)),                 # gamma2
        pl.BlockSpec((C_out, 1), lambda n: (0, 0)),                 # beta2
    ]
    out_specs = pl.BlockSpec((NB, C_out, L_id), lambda n: (n, 0, 0))

    # explicit VMEM budget: double-buffered in/out blocks + params + headroom
    blk_bytes = NB * (s * C_in * Lq + C_out * L_id) * 4
    par_bytes = 2 * (w1_r.size + w2_r.size) + 4 * (4 * C_out + 2 * C_in + 2)
    vmem_limit = int(min(64 * 1024 * 1024,
                         max(16 * 1024 * 1024,
                             8 * blk_bytes + 2 * par_bytes + (2 << 20))))

    fn = pl.pallas_call(
        kernel,
        out_shape=jax.ShapeDtypeStruct((Np, C_out, L_id), jnp.float32),
        grid_spec=pltpu.PrefetchScalarGridSpec(
            num_scalar_prefetch=0, grid=grid,
            in_specs=in_specs, out_specs=out_specs),
        compiler_params=pltpu.CompilerParams(
            dimension_semantics=("parallel",),
            vmem_limit_bytes=vmem_limit),
    )
    out = fn(xp, w1_r, b1_r, w2_r, b2_r, g1_r, be1_r, g2_r, be2_r)
    return out[:N] if Np != N else out


# ---------------- pure-JAX reference for verification ----------------
def basic_block_ref(x, params, *, kernel_size, stride, groups,
                    downsample, use_bn, use_do, is_first_block):
    w1, b1, w2, b2 = params["w1"], params["b1"], params["w2"], params["b2"]
    g1, be1, g2, be2 = (params["gamma1"], params["beta1"],
                        params["gamma2"], params["beta2"])
    s1 = stride if downsample else 1

    def ln_cf(v, gamma, beta):
        mu = jnp.mean(v, axis=1, keepdims=True)
        var = jnp.mean(jnp.square(v - mu), axis=1, keepdims=True)
        return ((v - mu) / jnp.sqrt(var + EPS)
                * gamma[None, :, None] + beta[None, :, None])

    def conv_same(v, w, b, s):
        L = v.shape[-1]
        _, padl, padr = _same_pad_conv(L, w.shape[-1], s)
        v = jnp.pad(v, ((0, 0), (0, 0), (padl, padr)))
        y = lax.conv_general_dilated(
            v, w, (s,), "VALID", dimension_numbers=("NCH", "OIH", "NCH"),
            feature_group_count=groups, preferred_element_type=jnp.float32)
        return y + b[None, :, None]

    def maxpool_same(v, k):
        L = v.shape[-1]
        out_dim, padl, padr = _same_pad_maxpool(L, k)
        v = jnp.pad(v, ((0, 0), (0, 0), (padl, padr)))
        n, c, lp = v.shape
        return jnp.max(v.reshape(n, c, out_dim, k), axis=-1)

    identity, out = x, x
    if (not is_first_block) and use_bn:
        out = ln_cf(out, g1, be1)
    out = jax.nn.relu(out)
    out = conv_same(out, w1, b1, s1)
    if use_bn:
        out = ln_cf(out, g2, be2)
    out = jax.nn.relu(out)
    out = conv_same(out, w2, b2, 1)
    if downsample:
        identity = maxpool_same(identity, s1)
    C_in, C_out = x.shape[1], w1.shape[0]
    if C_out != C_in:
        ch1 = (C_out - C_in) // 2
        ch2 = C_out - C_in - ch1
        identity = jnp.pad(identity, ((0, 0), (ch1, ch2), (0, 0)))
    if out.shape[-1] != identity.shape[-1]:
        out = jnp.pad(out, ((0, 0), (0, 0),
                            (0, identity.shape[-1] - out.shape[-1])))
    return out + identity


if __name__ == "__main__":
    key = jax.random.PRNGKey(0)
    N, C_in, L = 2, 4, 16
    C_out, K, stride, groups = 8, 3, 2, 1
    downsample, use_bn, use_do, is_first_block = True, True, False, False

    ks = jax.random.split(key, 9)
    x = jax.random.normal(ks[0], (N, C_in, L), jnp.float32)
    params = dict(
        w1=0.1 * jax.random.normal(ks[1], (C_out, C_in // groups, K), jnp.float32),
        b1=0.1 * jax.random.normal(ks[2], (C_out,), jnp.float32),
        w2=0.1 * jax.random.normal(ks[3], (C_out, C_out // groups, K), jnp.float32),
        b2=0.1 * jax.random.normal(ks[4], (C_out,), jnp.float32),
        gamma1=1.0 + 0.1 * jax.random.normal(ks[5], (C_in,), jnp.float32),
        beta1=0.1 * jax.random.normal(ks[6], (C_in,), jnp.float32),
        gamma2=1.0 + 0.1 * jax.random.normal(ks[7], (C_out,), jnp.float32),
        beta2=0.1 * jax.random.normal(ks[8], (C_out,), jnp.float32),
    )
    kwargs = dict(kernel_size=K, stride=stride, groups=groups,
                  downsample=downsample, use_bn=use_bn, use_do=use_do,
                  is_first_block=is_first_block)

    out = jax.block_until_ready(basic_block_pallas(x, params, **kwargs))
    ref = basic_block_ref(x, params, **kwargs)
    assert out.shape == ref.shape, (out.shape, ref.shape)
    # bf16 MXU operands with f32 accumulation -> slightly looser tolerance
    if not jnp.allclose(out, ref, rtol=2e-2, atol=2e-2):
        raise AssertionError(
            "mismatch: max abs diff = %g" % float(jnp.max(jnp.abs(out - ref))))
    print("KERNEL_OK")
</pallas_src>

<mosaic_0001>
module attributes {stable_mosaic.version = 11 : i64} {
  func.func @kernel(%arg0: i32, %arg1: memref<1x8x9xf32, #tpu.memory_space<vmem>>, %arg2: memref<8x12xbf16, #tpu.memory_space<vmem>>, %arg3: memref<8x1xf32, #tpu.memory_space<vmem>>, %arg4: memref<8x24xbf16, #tpu.memory_space<vmem>>, %arg5: memref<8x1xf32, #tpu.memory_space<vmem>>, %arg6: memref<4x1xf32, #tpu.memory_space<vmem>>, %arg7: memref<4x1xf32, #tpu.memory_space<vmem>>, %arg8: memref<8x1xf32, #tpu.memory_space<vmem>>, %arg9: memref<8x1xf32, #tpu.memory_space<vmem>>, %arg10: memref<1x8x8xf32, #tpu.memory_space<vmem>>) attributes {dimension_semantics = [#tpu.dimension_semantics<parallel>], iteration_bounds = array<i64: 2>, scalar_prefetch = 0 : i64, scratch_operands = 0 : i64, tpu.core_type = #tpu.core_type<tc>, window_params = [{transform_indices = @transform_0, window_bounds = array<i64: 1, 8, 9>}, {pipeline_mode = #tpu.pipeline_mode<synchronous>, transform_indices = @transform_1, window_bounds = array<i64: 8, 12>}, {pipeline_mode = #tpu.pipeline_mode<synchronous>, transform_indices = @transform_2, window_bounds = array<i64: 8, 1>}, {pipeline_mode = #tpu.pipeline_mode<synchronous>, transform_indices = @transform_3, window_bounds = array<i64: 8, 24>}, {pipeline_mode = #tpu.pipeline_mode<synchronous>, transform_indices = @transform_4, window_bounds = array<i64: 8, 1>}, {pipeline_mode = #tpu.pipeline_mode<synchronous>, transform_indices = @transform_5, window_bounds = array<i64: 4, 1>}, {pipeline_mode = #tpu.pipeline_mode<synchronous>, transform_indices = @transform_6, window_bounds = array<i64: 4, 1>}, {pipeline_mode = #tpu.pipeline_mode<synchronous>, transform_indices = @transform_7, window_bounds = array<i64: 8, 1>}, {pipeline_mode = #tpu.pipeline_mode<synchronous>, transform_indices = @transform_8, window_bounds = array<i64: 8, 1>}, {transform_indices = @transform_9, window_bounds = array<i64: 1, 8, 8>}]} {
    %0 = tpu.iota {dimensions = array<i32: 1>} : vector<4x9xi32>
    %c2_i32 = arith.constant 2 : i32
    %1 = vector.broadcast %c2_i32 : i32 to vector<4x9xi32>
    %2 = arith.muli %0, %1 : vector<4x9xi32>
    %c0_i32 = arith.constant 0 : i32
    %3 = vector.broadcast %c0_i32 : i32 to vector<4x9xi32>
    %4 = arith.addi %2, %3 : vector<4x9xi32>
    %c0_i32_0 = arith.constant 0 : i32
    %5 = vector.broadcast %c0_i32_0 : i32 to vector<4x9xi32>
    %6 = arith.cmpi sge, %4, %5 : vector<4x9xi32>
    %c16_i32 = arith.constant 16 : i32
    %7 = vector.broadcast %c16_i32 : i32 to vector<4x9xi32>
    %8 = arith.cmpi slt, %4, %7 : vector<4x9xi32>
    %9 = arith.andi %6, %8 : vector<4x9xi1>
    %10 = tpu.iota {dimensions = array<i32: 1>} : vector<4x9xi32>
    %c2_i32_1 = arith.constant 2 : i32
    %11 = vector.broadcast %c2_i32_1 : i32 to vector<4x9xi32>
    %12 = arith.muli %10, %11 : vector<4x9xi32>
    %c1_i32 = arith.constant 1 : i32
    %13 = vector.broadcast %c1_i32 : i32 to vector<4x9xi32>
    %14 = arith.addi %12, %13 : vector<4x9xi32>
    %c0_i32_2 = arith.constant 0 : i32
    %15 = vector.broadcast %c0_i32_2 : i32 to vector<4x9xi32>
    %16 = arith.cmpi sge, %14, %15 : vector<4x9xi32>
    %c16_i32_3 = arith.constant 16 : i32
    %17 = vector.broadcast %c16_i32_3 : i32 to vector<4x9xi32>
    %18 = arith.cmpi slt, %14, %17 : vector<4x9xi32>
    %19 = arith.andi %16, %18 : vector<4x9xi1>
    %c0 = arith.constant 0 : index
    %c0_4 = arith.constant 0 : index
    %c0_5 = arith.constant 0 : index
    %20 = vector.load %arg1[%c0, %c0_4, %c0_5] : memref<1x8x9xf32, #tpu.memory_space<vmem>>, vector<1x8x9xf32>
    %21 = vector.shape_cast %20 : vector<1x8x9xf32> to vector<8x9xf32>
    %22 = vector.extract_strided_slice %21 {offsets = [0, 0], sizes = [4, 9], strides = [1, 1]} : vector<8x9xf32> to vector<4x9xf32>
    %23 = vector.extract_strided_slice %21 {offsets = [4, 0], sizes = [4, 9], strides = [1, 1]} : vector<8x9xf32> to vector<4x9xf32>
    %cst = arith.constant dense<0.000000e+00> : vector<9xf32>
    %24 = vector.multi_reduction <add>, %22, %cst [0] : vector<4x9xf32> to vector<9xf32>
    %25 = vector.shape_cast %24 : vector<9xf32> to vector<1x9xf32>
    %cst_6 = arith.constant 4.000000e+00 : f32
    %26 = vector.broadcast %cst_6 : f32 to vector<1x9xf32>
    %27 = arith.divf %25, %26 : vector<1x9xf32>
    %28 = vector.broadcast %27 : vector<1x9xf32> to vector<4x9xf32>
    %29 = arith.subf %22, %28 : vector<4x9xf32>
    %30 = arith.mulf %29, %29 : vector<4x9xf32>
    %cst_7 = arith.constant dense<0.000000e+00> : vector<9xf32>
    %31 = vector.multi_reduction <add>, %30, %cst_7 [0] : vector<4x9xf32> to vector<9xf32>
    %32 = vector.shape_cast %31 : vector<9xf32> to vector<1x9xf32>
    %cst_8 = arith.constant 4.000000e+00 : f32
    %33 = vector.broadcast %cst_8 : f32 to vector<1x9xf32>
    %34 = arith.divf %32, %33 : vector<1x9xf32>
    %35 = vector.broadcast %27 : vector<1x9xf32> to vector<4x9xf32>
    %36 = arith.subf %22, %35 : vector<4x9xf32>
    %cst_9 = arith.constant 9.99999974E-6 : f32
    %37 = vector.broadcast %cst_9 : f32 to vector<1x9xf32>
    %38 = arith.addf %34, %37 : vector<1x9xf32>
    %39 = math.rsqrt %38 : vector<1x9xf32>
    %40 = vector.broadcast %39 : vector<1x9xf32> to vector<4x9xf32>
    %41 = arith.mulf %36, %40 : vector<4x9xf32>
    %c0_10 = arith.constant 0 : index
    %c0_11 = arith.constant 0 : index
    %42 = vector.load %arg6[%c0_10, %c0_11] : memref<4x1xf32, #tpu.memory_space<vmem>>, vector<4x1xf32>
    %43 = vector.broadcast %42 : vector<4x1xf32> to vector<4x9xf32>
    %44 = arith.mulf %41, %43 : vector<4x9xf32>
    %c0_12 = arith.constant 0 : index
    %c0_13 = arith.constant 0 : index
    %45 = vector.load %arg7[%c0_12, %c0_13] : memref<4x1xf32, #tpu.memory_space<vmem>>, vector<4x1xf32>
    %46 = vector.broadcast %45 : vector<4x1xf32> to vector<4x9xf32>
    %47 = arith.addf %44, %46 : vector<4x9xf32>
    %cst_14 = arith.constant 0.000000e+00 : f32
    %48 = vector.broadcast %cst_14 : f32 to vector<4x9xf32>
    %49 = arith.select %9, %47, %48 : vector<4x9xi1>, vector<4x9xf32>
    %cst_15 = arith.constant 0.000000e+00 : f32
    %50 = vector.broadcast %cst_15 : f32 to vector<4x9xf32>
    %51 = arith.maximumf %49, %50 : vector<4x9xf32>
    %cst_16 = arith.constant dense<0.000000e+00> : vector<9xf32>
    %52 = vector.multi_reduction <add>, %23, %cst_16 [0] : vector<4x9xf32> to vector<9xf32>
    %53 = vector.shape_cast %52 : vector<9xf32> to vector<1x9xf32>
    %cst_17 = arith.constant 4.000000e+00 : f32
    %54 = vector.broadcast %cst_17 : f32 to vector<1x9xf32>
    %55 = arith.divf %53, %54 : vector<1x9xf32>
    %56 = vector.broadcast %55 : vector<1x9xf32> to vector<4x9xf32>
    %57 = arith.subf %23, %56 : vector<4x9xf32>
    %58 = arith.mulf %57, %57 : vector<4x9xf32>
    %cst_18 = arith.constant dense<0.000000e+00> : vector<9xf32>
    %59 = vector.multi_reduction <add>, %58, %cst_18 [0] : vector<4x9xf32> to vector<9xf32>
    %60 = vector.shape_cast %59 : vector<9xf32> to vector<1x9xf32>
    %cst_19 = arith.constant 4.000000e+00 : f32
    %61 = vector.broadcast %cst_19 : f32 to vector<1x9xf32>
    %62 = arith.divf %60, %61 : vector<1x9xf32>
    %63 = vector.broadcast %55 : vector<1x9xf32> to vector<4x9xf32>
    %64 = arith.subf %23, %63 : vector<4x9xf32>
    %cst_20 = arith.constant 9.99999974E-6 : f32
    %65 = vector.broadcast %cst_20 : f32 to vector<1x9xf32>
    %66 = arith.addf %62, %65 : vector<1x9xf32>
    %67 = math.rsqrt %66 : vector<1x9xf32>
    %68 = vector.broadcast %67 : vector<1x9xf32> to vector<4x9xf32>
    %69 = arith.mulf %64, %68 : vector<4x9xf32>
    %c0_21 = arith.constant 0 : index
    %c0_22 = arith.constant 0 : index
    %70 = vector.load %arg6[%c0_21, %c0_22] : memref<4x1xf32, #tpu.memory_space<vmem>>, vector<4x1xf32>
    %71 = vector.broadcast %70 : vector<4x1xf32> to vector<4x9xf32>
    %72 = arith.mulf %69, %71 : vector<4x9xf32>
    %c0_23 = arith.constant 0 : index
    %c0_24 = arith.constant 0 : index
    %73 = vector.load %arg7[%c0_23, %c0_24] : memref<4x1xf32, #tpu.memory_space<vmem>>, vector<4x1xf32>
    %74 = vector.broadcast %73 : vector<4x1xf32> to vector<4x9xf32>
    %75 = arith.addf %72, %74 : vector<4x9xf32>
    %cst_25 = arith.constant 0.000000e+00 : f32
    %76 = vector.broadcast %cst_25 : f32 to vector<4x9xf32>
    %77 = arith.select %19, %75, %76 : vector<4x9xi1>, vector<4x9xf32>
    %cst_26 = arith.constant 0.000000e+00 : f32
    %78 = vector.broadcast %cst_26 : f32 to vector<4x9xf32>
    %79 = arith.maximumf %77, %78 : vector<4x9xf32>
    %80 = vector.extract_strided_slice %51 {offsets = [0, 0], sizes = [4, 8], strides = [1, 1]} : vector<4x9xf32> to vector<4x8xf32>
    %81 = vector.extract_strided_slice %79 {offsets = [0, 0], sizes = [4, 8], strides = [1, 1]} : vector<4x9xf32> to vector<4x8xf32>
    %82 = vector.extract_strided_slice %51 {offsets = [0, 1], sizes = [4, 8], strides = [1, 1]} : vector<4x9xf32> to vector<4x8xf32>
    %83 = tpu.concatenate %80, %81, %82 in 0 : vector<4x8xf32>, vector<4x8xf32>, vector<4x8xf32> -> vector<12x8xf32>
    %c0_27 = arith.constant 0 : index
    %c0_28 = arith.constant 0 : index
    %84 = vector.load %arg2[%c0_27, %c0_28] : memref<8x12xbf16, #tpu.memory_space<vmem>>, vector<8x12xbf16>
    %85 = arith.truncf %83 : vector<12x8xf32> to vector<12x8xbf16>
    %cst_29 = arith.constant dense<0.000000e+00> : vector<8x8xf32>
    %86 = tpu.matmul %84, %85, %cst_29 {dimension_numbers = #tpu.dot_dimension_numbers<[1], [0], [0], [1], [0, 0, 1, 1], [], []>} : vector<8x12xbf16>, vector<12x8xbf16>, vector<8x8xf32> -> vector<8x8xf32>
    %c0_30 = arith.constant 0 : index
    %c0_31 = arith.constant 0 : index
    %87 = vector.load %arg3[%c0_30, %c0_31] : memref<8x1xf32, #tpu.memory_space<vmem>>, vector<8x1xf32>
    %88 = vector.broadcast %87 : vector<8x1xf32> to vector<8x8xf32>
    %89 = arith.addf %86, %88 : vector<8x8xf32>
    %cst_32 = arith.constant dense<0.000000e+00> : vector<8xf32>
    %90 = vector.multi_reduction <add>, %89, %cst_32 [0] : vector<8x8xf32> to vector<8xf32>
    %91 = vector.shape_cast %90 : vector<8xf32> to vector<1x8xf32>
    %cst_33 = arith.constant 8.000000e+00 : f32
    %92 = vector.broadcast %cst_33 : f32 to vector<1x8xf32>
    %93 = arith.divf %91, %92 : vector<1x8xf32>
    %94 = vector.broadcast %93 : vector<1x8xf32> to vector<8x8xf32>
    %95 = arith.subf %89, %94 : vector<8x8xf32>
    %96 = arith.mulf %95, %95 : vector<8x8xf32>
    %cst_34 = arith.constant dense<0.000000e+00> : vector<8xf32>
    %97 = vector.multi_reduction <add>, %96, %cst_34 [0] : vector<8x8xf32> to vector<8xf32>
    %98 = vector.shape_cast %97 : vector<8xf32> to vector<1x8xf32>
    %cst_35 = arith.constant 8.000000e+00 : f32
    %99 = vector.broadcast %cst_35 : f32 to vector<1x8xf32>
    %100 = arith.divf %98, %99 : vector<1x8xf32>
    %101 = vector.broadcast %93 : vector<1x8xf32> to vector<8x8xf32>
    %102 = arith.subf %89, %101 : vector<8x8xf32>
    %cst_36 = arith.constant 9.99999974E-6 : f32
    %103 = vector.broadcast %cst_36 : f32 to vector<1x8xf32>
    %104 = arith.addf %100, %103 : vector<1x8xf32>
    %105 = math.rsqrt %104 : vector<1x8xf32>
    %106 = vector.broadcast %105 : vector<1x8xf32> to vector<8x8xf32>
    %107 = arith.mulf %102, %106 : vector<8x8xf32>
    %c0_37 = arith.constant 0 : index
    %c0_38 = arith.constant 0 : index
    %108 = vector.load %arg8[%c0_37, %c0_38] : memref<8x1xf32, #tpu.memory_space<vmem>>, vector<8x1xf32>
    %109 = vector.broadcast %108 : vector<8x1xf32> to vector<8x8xf32>
    %110 = arith.mulf %107, %109 : vector<8x8xf32>
    %c0_39 = arith.constant 0 : index
    %c0_40 = arith.constant 0 : index
    %111 = vector.load %arg9[%c0_39, %c0_40] : memref<8x1xf32, #tpu.memory_space<vmem>>, vector<8x1xf32>
    %112 = vector.broadcast %111 : vector<8x1xf32> to vector<8x8xf32>
    %113 = arith.addf %110, %112 : vector<8x8xf32>
    %cst_41 = arith.constant 0.000000e+00 : f32
    %114 = vector.broadcast %cst_41 : f32 to vector<8x8xf32>
    %115 = arith.maximumf %113, %114 : vector<8x8xf32>
    %cst_42 = arith.constant 0.000000e+00 : f32
    %116 = vector.broadcast %cst_42 : f32 to vector<8x1xf32>
    %cst_43 = arith.constant 0.000000e+00 : f32
    %117 = vector.broadcast %cst_43 : f32 to vector<8x1xf32>
    %118 = tpu.concatenate %116, %115, %117 in 1 : vector<8x1xf32>, vector<8x8xf32>, vector<8x1xf32> -> vector<8x10xf32>
    %119 = vector.extract_strided_slice %118 {offsets = [0, 0], sizes = [8, 8], strides = [1, 1]} : vector<8x10xf32> to vector<8x8xf32>
    %120 = vector.extract_strided_slice %118 {offsets = [0, 1], sizes = [8, 8], strides = [1, 1]} : vector<8x10xf32> to vector<8x8xf32>
    %121 = vector.extract_strided_slice %118 {offsets = [0, 2], sizes = [8, 8], strides = [1, 1]} : vector<8x10xf32> to vector<8x8xf32>
    %122 = tpu.concatenate %119, %120, %121 in 0 : vector<8x8xf32>, vector<8x8xf32>, vector<8x8xf32> -> vector<24x8xf32>
    %c0_44 = arith.constant 0 : index
    %c0_45 = arith.constant 0 : index
    %123 = vector.load %arg4[%c0_44, %c0_45] : memref<8x24xbf16, #tpu.memory_space<vmem>>, vector<8x24xbf16>
    %124 = arith.truncf %122 : vector<24x8xf32> to vector<24x8xbf16>
    %cst_46 = arith.constant dense<0.000000e+00> : vector<8x8xf32>
    %125 = tpu.matmul %123, %124, %cst_46 {dimension_numbers = #tpu.dot_dimension_numbers<[1], [0], [0], [1], [0, 0, 1, 1], [], []>} : vector<8x24xbf16>, vector<24x8xbf16>, vector<8x8xf32> -> vector<8x8xf32>
    %c0_47 = arith.constant 0 : index
    %c0_48 = arith.constant 0 : index
    %126 = vector.load %arg5[%c0_47, %c0_48] : memref<8x1xf32, #tpu.memory_space<vmem>>, vector<8x1xf32>
    %127 = vector.broadcast %126 : vector<8x1xf32> to vector<8x8xf32>
    %128 = arith.addf %125, %127 : vector<8x8xf32>
    %129 = vector.extract_strided_slice %22 {offsets = [0, 0], sizes = [4, 8], strides = [1, 1]} : vector<4x9xf32> to vector<4x8xf32>
    %130 = vector.extract_strided_slice %23 {offsets = [0, 0], sizes = [4, 8], strides = [1, 1]} : vector<4x9xf32> to vector<4x8xf32>
    %131 = arith.maximumf %129, %130 : vector<4x8xf32>
    %cst_49 = arith.constant 0.000000e+00 : f32
    %132 = vector.broadcast %cst_49 : f32 to vector<2x8xf32>
    %cst_50 = arith.constant 0.000000e+00 : f32
    %133 = vector.broadcast %cst_50 : f32 to vector<2x8xf32>
    %134 = tpu.concatenate %132, %131, %133 in 0 : vector<2x8xf32>, vector<4x8xf32>, vector<2x8xf32> -> vector<8x8xf32>
    %135 = arith.addf %128, %134 : vector<8x8xf32>
    %c0_51 = arith.constant 0 : index
    %c0_52 = arith.constant 0 : index
    %c0_53 = arith.constant 0 : index
    %136 = vector.load %arg10[%c0_51, %c0_52, %c0_53] : memref<1x8x8xf32, #tpu.memory_space<vmem>>, vector<1x8x8xf32>
    %137 = vector.shape_cast %136 : vector<1x8x8xf32> to vector<8x8xf32>
    %138 = vector.shape_cast %135 : vector<8x8xf32> to vector<1x8x8xf32>
    tpu.vector_store %arg10[%c0_51, %c0_52, %c0_53], %138 {strides = array<i32>} : memref<1x8x8xf32, #tpu.memory_space<vmem>>, vector<1x8x8xf32>,
    return
  }
  func.func @transform_0(%arg0: i32) -> (i32, i32, i32) {
    %c0_i32 = arith.constant 0 : i32
    %c0_i32_0 = arith.constant 0 : i32
    %c0_i32_1 = arith.constant 0 : i32
    return %arg0, %c0_i32, %c0_i32_0 : i32, i32, i32
  }
  func.func @transform_1(%arg0: i32) -> (i32, i32) {
    %c0_i32 = arith.constant 0 : i32
    %c0_i32_0 = arith.constant 0 : i32
    %c0_i32_1 = arith.constant 0 : i32
    return %c0_i32, %c0_i32_0 : i32, i32
  }
  func.func @transform_2(%arg0: i32) -> (i32, i32) {
    %c0_i32 = arith.constant 0 : i32
    %c0_i32_0 = arith.constant 0 : i32
    %c0_i32_1 = arith.constant 0 : i32
    return %c0_i32, %c0_i32_0 : i32, i32
  }
  func.func @transform_3(%arg0: i32) -> (i32, i32) {
    %c0_i32 = arith.constant 0 : i32
    %c0_i32_0 = arith.constant 0 : i32
    %c0_i32_1 = arith.constant 0 : i32
    return %c0_i32, %c0_i32_0 : i32, i32
  }
  func.func @transform_4(%arg0: i32) -> (i32, i32) {
    %c0_i32 = arith.constant 0 : i32
    %c0_i32_0 = arith.constant 0 : i32
    %c0_i32_1 = arith.constant 0 : i32
    return %c0_i32, %c0_i32_0 : i32, i32
  }
  func.func @transform_5(%arg0: i32) -> (i32, i32) {
    %c0_i32 = arith.constant 0 : i32
    %c0_i32_0 = arith.constant 0 : i32
    %c0_i32_1 = arith.constant 0 : i32
    return %c0_i32, %c0_i32_0 : i32, i32
  }
  func.func @transform_6(%arg0: i32) -> (i32, i32) {
    %c0_i32 = arith.constant 0 : i32
    %c0_i32_0 = arith.constant 0 : i32
    %c0_i32_1 = arith.constant 0 : i32
    return %c0_i32, %c0_i32_0 : i32, i32
  }
  func.func @transform_7(%arg0: i32) -> (i32, i32) {
    %c0_i32 = arith.constant 0 : i32
    %c0_i32_0 = arith.constant 0 : i32
    %c0_i32_1 = arith.constant 0 : i32
    return %c0_i32, %c0_i32_0 : i32, i32
  }
  func.func @transform_8(%arg0: i32) -> (i32, i32) {
    %c0_i32 = arith.constant 0 : i32
    %c0_i32_0 = arith.constant 0 : i32
    %c0_i32_1 = arith.constant 0 : i32
    return %c0_i32, %c0_i32_0 : i32, i32
  }
  func.func @transform_9(%arg0: i32) -> (i32, i32, i32) {
    %c0_i32 = arith.constant 0 : i32
    %c0_i32_0 = arith.constant 0 : i32
    %c0_i32_1 = arith.constant 0 : i32
    return %arg0, %c0_i32, %c0_i32_0 : i32, i32, i32
  }
}

</mosaic_0001>

<llo_original>
// kernel: tpu_custom_call.1
$region0: #{tpu_custom_call.1}
  #allocation0 [shape = 'u32[]', space=smem, size = 0x4, offset = 0x4, fixed_abs, tag = 'smem constant byte address 0x4 - core index']
  #allocation1 [shape = 'u32[144,128]{1,0:T(1,128)}', space=vmem, size = 0x12000, scoped, tag = 'internal scratch']
  %s0 = inlined_call_operand.vmem [shape: f32[2,8,9], index: 0, kind: input, shape index: {}]
  %s1 = inlined_call_operand.vmem [shape: bf16[8,12], index: 1, kind: input, shape index: {}]
  %s2 = inlined_call_operand.vmem [shape: f32[8,1], index: 2, kind: input, shape index: {}]
  %s3 = inlined_call_operand.vmem [shape: bf16[8,24], index: 3, kind: input, shape index: {}]
  %s4 = inlined_call_operand.vmem [shape: f32[8,1], index: 4, kind: input, shape index: {}]
  %s5 = inlined_call_operand.vmem [shape: f32[4,1], index: 5, kind: input, shape index: {}]
  %s6 = inlined_call_operand.vmem [shape: f32[4,1], index: 6, kind: input, shape index: {}]
  %s7 = inlined_call_operand.vmem [shape: f32[8,1], index: 7, kind: input, shape index: {}]
  %s8 = inlined_call_operand.vmem [shape: f32[8,1], index: 8, kind: input, shape index: {}]
  %s9 = inlined_call_operand.hbm [shape: f32[2,8,8], index: 9, kind: output, shape index: {}]
  %s10 = sld [smem:[#allocation0]]
  $region69: #{tpu_custom_call.1} parent=0
    _
  %s12 = ssub.s32 1, %s10
  %s13 = scalar_select 0, %s12, %s10
  $region1: #{tpu_custom_call.1} parent=0
    #allocation2 [shape = 'u8[8192]{0}', space=vmem, size = 0x2000, scoped, tag = 'output window, operand 0']
    #allocation3 [shape = 's32[2]{0}', space=sflag, size = 0x8, scoped, tag = 'scoped memory for tpu_custom_call.1']
    %14 = vsyncpa [#allocation3], 0
    %s15 = scalar_lea.sflag [#allocation3], 1
    %16 = vsyncpa %s15, 0
    loop: start=0, step=1, limit=4
    $region2: #{tpu_custom_call.1} parent=1 // loop_pre_header
      _
    $region3: #{tpu_custom_call.1} parent=1 // loop_header
      %s18 = sphi 0, %s22
      %p19 = scmp.ge.s32.totalorder %s18, 4
      %s28 = sphi 0, %s30
      %s31 = sphi 0, %s28
      %s32 = sphi 0, %s31
      %s48 = sphi 0, %s32
      %s52 = sphi 0, %s52
      %s54 = sphi 0, %s52
      %s55 = sphi 0, %s54
      %s69 = sphi 0, %s55
      %s73 = sphi 0, %s73
      %s75 = sphi 0, %s73
      %s76 = sphi 0, %s75
      %s90 = sphi 0, %s76
      %s94 = sphi 0, %s94
      %s96 = sphi 0, %s94
      %s97 = sphi 0, %s96
      %s111 = sphi 0, %s97
      %s115 = sphi 0, %s115
      %s117 = sphi 0, %s115
      %s118 = sphi 0, %s117
      %s132 = sphi 0, %s118
      %s136 = sphi 0, %s136
      %s138 = sphi 0, %s136
      %s139 = sphi 0, %s138
      %s153 = sphi 0, %s139
      %s157 = sphi 0, %s157
      %s159 = sphi 0, %s157
      %s160 = sphi 0, %s159
      %s174 = sphi 0, %s160
      %s178 = sphi 0, %s178
      %s180 = sphi 0, %s178
      %s181 = sphi 0, %s180
      %s195 = sphi 0, %s181
      %s199 = sphi 0, %s199
      %s201 = sphi 0, %s199
      %s202 = sphi 0, %s201
      %s216 = sphi 0, %s202
      %s222 = sphi 0, %s224
      %s225 = sphi 0, %s222
      %s226 = sphi 0, %s225
      %s242 = sphi 0, %s226
    $region4: #{tpu_custom_call.1} parent=1 // loop_header_branch
      %21 = sbr.rel (%p19) target = $region8
    $region5: #{tpu_custom_call.1} parent=1 // loop_body
      %s23 = ssub.s32 %s18, 1
      %s24 = ssub.s32 %s18, 2
      %s25 = sadd.s32 %s18, 1
      %s26 = ssub.s32 %s18, %s25
      %p27 = scmp.eq.s32.totalorder %s26, 0
      %s29 = sadd.s32 %s28, 1
      %s30 = scalar_select %p27, %s28, %s29
      %p33 = pneg %p27
      %p34 = scmp.eq.s32.totalorder %s18, 1
      %p35 = por %p33, %p34
      %p36 = scmp.ne.s32.totalorder %s28, %s31
      %p37 = scmp.eq.s32.totalorder %s18, 0
      %p38 = por %p36, %p37
      %p39 = scmp.ne.s32.totalorder %s28, %s31
      %p40 = scmp.eq.s32.totalorder %s23, 1
      %p41 = por %p39, %p40
      %p42 = scmp.ne.s32.totalorder %s31, %s32
      %p43 = scmp.eq.s32.totalorder %s23, 0
      %p44 = por %p42, %p43
      %p45 = scmp.ne.s32.totalorder %s31, %s32
      %p46 = scmp.eq.s32.totalorder %s24, 1
      %p47 = por %p45, %p46
      %p49 = scmp.ne.s32.totalorder %s32, %s48
      %p50 = scmp.eq.s32.totalorder %s24, 0
      %p51 = por %p49, %p50
      %s53 = sadd.s32 %s52, 1
      %p56 = scmp.eq.s32.totalorder %s18, 1
      %p57 = scmp.ne.s32.totalorder %s52, %s54
      %p58 = scmp.eq.s32.totalorder %s18, 0
      %p59 = por %p57, %p58
      %p60 = scmp.ne.s32.totalorder %s52, %s54
      %p61 = scmp.eq.s32.totalorder %s23, 1
      %p62 = por %p60, %p61
      %p63 = scmp.ne.s32.totalorder %s54, %s55
      %p64 = scmp.eq.s32.totalorder %s23, 0
      %p65 = por %p63, %p64
      %p66 = scmp.ne.s32.totalorder %s54, %s55
      %p67 = scmp.eq.s32.totalorder %s24, 1
      %p68 = por %p66, %p67
      %p70 = scmp.ne.s32.totalorder %s55, %s69
      %p71 = scmp.eq.s32.totalorder %s24, 0
      %p72 = por %p70, %p71
      %s74 = sadd.s32 %s73, 1
      %p77 = scmp.eq.s32.totalorder %s18, 1
      %p78 = scmp.ne.s32.totalorder %s73, %s75
      %p79 = scmp.eq.s32.totalorder %s18, 0
      %p80 = por %p78, %p79
      %p81 = scmp.ne.s32.totalorder %s73, %s75
      %p82 = scmp.eq.s32.totalorder %s23, 1
      %p83 = por %p81, %p82
      %p84 = scmp.ne.s32.totalorder %s75, %s76
      %p85 = scmp.eq.s32.totalorder %s23, 0
      %p86 = por %p84, %p85
      %p87 = scmp.ne.s32.totalorder %s75, %s76
      %p88 = scmp.eq.s32.totalorder %s24, 1
      %p89 = por %p87, %p88
      %p91 = scmp.ne.s32.totalorder %s76, %s90
      %p92 = scmp.eq.s32.totalorder %s24, 0
      %p93 = por %p91, %p92
      %s95 = sadd.s32 %s94, 1
      %p98 = scmp.eq.s32.totalorder %s18, 1
      %p99 = scmp.ne.s32.totalorder %s94, %s96
      %p100 = scmp.eq.s32.totalorder %s18, 0
      %p101 = por %p99, %p100
      %p102 = scmp.ne.s32.totalorder %s94, %s96
      %p103 = scmp.eq.s32.totalorder %s23, 1
      %p104 = por %p102, %p103
      %p105 = scmp.ne.s32.totalorder %s96, %s97
      %p106 = scmp.eq.s32.totalorder %s23, 0
      %p107 = por %p105, %p106
      %p108 = scmp.ne.s32.totalorder %s96, %s97
      %p109 = scmp.eq.s32.totalorder %s24, 1
      %p110 = por %p108, %p109
      %p112 = scmp.ne.s32.totalorder %s97, %s111
      %p113 = scmp.eq.s32.totalorder %s24, 0
      %p114 = por %p112, %p113
      %s116 = sadd.s32 %s115, 1
      %p119 = scmp.eq.s32.totalorder %s18, 1
      %p120 = scmp.ne.s32.totalorder %s115, %s117
      %p121 = scmp.eq.s32.totalorder %s18, 0
      %p122 = por %p120, %p121
      %p123 = scmp.ne.s32.totalorder %s115, %s117
      %p124 = scmp.eq.s32.totalorder %s23, 1
      %p125 = por %p123, %p124
      %p126 = scmp.ne.s32.totalorder %s117, %s118
      %p127 = scmp.eq.s32.totalorder %s23, 0
      %p128 = por %p126, %p127
      %p129 = scmp.ne.s32.totalorder %s117, %s118
      %p130 = scmp.eq.s32.totalorder %s24, 1
      %p131 = por %p129, %p130
      %p133 = scmp.ne.s32.totalorder %s118, %s132
      %p134 = scmp.eq.s32.totalorder %s24, 0
      %p135 = por %p133, %p134
      %s137 = sadd.s32 %s136, 1
      %p140 = scmp.eq.s32.totalorder %s18, 1
      %p141 = scmp.ne.s32.totalorder %s136, %s138
      %p142 = scmp.eq.s32.totalorder %s18, 0
      %p143 = por %p141, %p142
      %p144 = scmp.ne.s32.totalorder %s136, %s138
      %p145 = scmp.eq.s32.totalorder %s23, 1
      %p146 = por %p144, %p145
      %p147 = scmp.ne.s32.totalorder %s138, %s139
      %p148 = scmp.eq.s32.totalorder %s23, 0
      %p149 = por %p147, %p148
      %p150 = scmp.ne.s32.totalorder %s138, %s139
      %p151 = scmp.eq.s32.totalorder %s24, 1
      %p152 = por %p150, %p151
      %p154 = scmp.ne.s32.totalorder %s139, %s153
      %p155 = scmp.eq.s32.totalorder %s24, 0
      %p156 = por %p154, %p155
      %s158 = sadd.s32 %s157, 1
      %p161 = scmp.eq.s32.totalorder %s18, 1
      %p162 = scmp.ne.s32.totalorder %s157, %s159
      %p163 = scmp.eq.s32.totalorder %s18, 0
      %p164 = por %p162, %p163
      %p165 = scmp.ne.s32.totalorder %s157, %s159
      %p166 = scmp.eq.s32.totalorder %s23, 1
      %p167 = por %p165, %p166
      %p168 = scmp.ne.s32.totalorder %s159, %s160
      %p169 = scmp.eq.s32.totalorder %s23, 0
      %p170 = por %p168, %p169
      %p171 = scmp.ne.s32.totalorder %s159, %s160
      %p172 = scmp.eq.s32.totalorder %s24, 1
      %p173 = por %p171, %p172
      %p175 = scmp.ne.s32.totalorder %s160, %s174
      %p176 = scmp.eq.s32.totalorder %s24, 0
      %p177 = por %p175, %p176
      %s179 = sadd.s32 %s178, 1
      %p182 = scmp.eq.s32.totalorder %s18, 1
      %p183 = scmp.ne.s32.totalorder %s178, %s180
      %p184 = scmp.eq.s32.totalorder %s18, 0
      %p185 = por %p183, %p184
      %p186 = scmp.ne.s32.totalorder %s178, %s180
      %p187 = scmp.eq.s32.totalorder %s23, 1
      %p188 = por %p186, %p187
      %p189 = scmp.ne.s32.totalorder %s180, %s181
      %p190 = scmp.eq.s32.totalorder %s23, 0
      %p191 = por %p189, %p190
      %p192 = scmp.ne.s32.totalorder %s180, %s181
      %p193 = scmp.eq.s32.totalorder %s24, 1
      %p194 = por %p192, %p193
      %p196 = scmp.ne.s32.totalorder %s181, %s195
      %p197 = scmp.eq.s32.totalorder %s24, 0
      %p198 = por %p196, %p197
      %s200 = sadd.s32 %s199, 1
      %p203 = scmp.eq.s32.totalorder %s18, 1
      %p204 = scmp.ne.s32.totalorder %s199, %s201
      %p205 = scmp.eq.s32.totalorder %s18, 0
      %p206 = por %p204, %p205
      %p207 = scmp.ne.s32.totalorder %s199, %s201
      %p208 = scmp.eq.s32.totalorder %s23, 1
      %p209 = por %p207, %p208
      %p210 = scmp.ne.s32.totalorder %s201, %s202
      %p211 = scmp.eq.s32.totalorder %s23, 0
      %p212 = por %p210, %p211
      %p213 = scmp.ne.s32.totalorder %s201, %s202
      %p214 = scmp.eq.s32.totalorder %s24, 1
      %p215 = por %p213, %p214
      %p217 = scmp.ne.s32.totalorder %s202, %s216
      %p218 = scmp.eq.s32.totalorder %s24, 0
      %p219 = por %p217, %p218
      %s220 = ssub.s32 %s18, %s25
      %p221 = scmp.eq.s32.totalorder %s220, 0
      %s223 = sadd.s32 %s222, 1
      %s224 = scalar_select %p221, %s222, %s223
      %p227 = pneg %p221
      %p228 = scmp.eq.s32.totalorder %s18, 1
      %p229 = por %p227, %p228
      %p230 = scmp.ne.s32.totalorder %s222, %s225
      %p231 = scmp.eq.s32.totalorder %s18, 0
      %p232 = por %p230, %p231
      %p233 = scmp.ne.s32.totalorder %s222, %s225
      %p234 = scmp.eq.s32.totalorder %s23, 1
      %p235 = por %p233, %p234
      %p236 = scmp.ne.s32.totalorder %s225, %s226
      %p237 = scmp.eq.s32.totalorder %s23, 0
      %p238 = por %p236, %p237
      %p239 = scmp.ne.s32.totalorder %s225, %s226
      %p240 = scmp.eq.s32.totalorder %s24, 1
      %p241 = por %p239, %p240
      %p243 = scmp.ne.s32.totalorder %s226, %s242
      %p244 = scmp.eq.s32.totalorder %s24, 0
      %p245 = por %p243, %p244
      %p246 = scmp.le.s32.totalorder 1, %s18
      %p247 = scmp.lt.s32.totalorder %s18, 3
      %p248 = pnand %p246, %p247
      %p249 = pneg %p248
      // Predicated region
      $region9: #{tpu_custom_call.1} parent=5 // pred_check
        _
      $region10: #{tpu_custom_call.1} parent=5 // pred_check_branch
        %251 = sbr.rel (%p248) target = $region12
      $region11: #{tpu_custom_call.1} parent=5 // pred_region
        %s252 = ssub.s32 %s18, 1
        // Predicated region
        $region13: #{tpu_custom_call.1} parent=11 // pred_check
          %p253 = pneg %p65
        $region14: #{tpu_custom_call.1} parent=11 // pred_check_branch
          %255 = sbr.rel (%p253) target = $region16
        $region15: #{tpu_custom_call.1} parent=11 // pred_region
          _
        $region16: #{tpu_custom_call.1} parent=11 // pred_fallthru
          _
        // Predicated region
        $region17: #{tpu_custom_call.1} parent=11 // pred_check
          %p256 = pneg %p86
        $region18: #{tpu_custom_call.1} parent=11 // pred_check_branch
          %258 = sbr.rel (%p256) target = $region20
        $region19: #{tpu_custom_call.1} parent=11 // pred_region
          _
        $region20: #{tpu_custom_call.1} parent=11 // pred_fallthru
          _
        // Predicated region
        $region21: #{tpu_custom_call.1} parent=11 // pred_check
          %p259 = pneg %p107
        $region22: #{tpu_custom_call.1} parent=11 // pred_check_branch
          %261 = sbr.rel (%p259) target = $region24
        $region23: #{tpu_custom_call.1} parent=11 // pred_region
          _
        $region24: #{tpu_custom_call.1} parent=11 // pred_fallthru
          _
        // Predicated region
        $region25: #{tpu_custom_call.1} parent=11 // pred_check
          %p262 = pneg %p128
        $region26: #{tpu_custom_call.1} parent=11 // pred_check_branch
          %264 = sbr.rel (%p262) target = $region28
        $region27: #{tpu_custom_call.1} parent=11 // pred_region
          _
        $region28: #{tpu_custom_call.1} parent=11 // pred_fallthru
          _
        // Predicated region
        $region29: #{tpu_custom_call.1} parent=11 // pred_check
          %p265 = pneg %p149
        $region30: #{tpu_custom_call.1} parent=11 // pred_check_branch
          %267 = sbr.rel (%p265) target = $region32
        $region31: #{tpu_custom_call.1} parent=11 // pred_region
          _
        $region32: #{tpu_custom_call.1} parent=11 // pred_fallthru
          _
        // Predicated region
        $region33: #{tpu_custom_call.1} parent=11 // pred_check
          %p268 = pneg %p170
        $region34: #{tpu_custom_call.1} parent=11 // pred_check_branch
          %270 = sbr.rel (%p268) target = $region36
        $region35: #{tpu_custom_call.1} parent=11 // pred_region
          _
        $region36: #{tpu_custom_call.1} parent=11 // pred_fallthru
          _
        // Predicated region
        $region37: #{tpu_custom_call.1} parent=11 // pred_check
          %p271 = pneg %p191
        $region38: #{tpu_custom_call.1} parent=11 // pred_check_branch
          %273 = sbr.rel (%p271) target = $region40
        $region39: #{tpu_custom_call.1} parent=11 // pred_region
          _
        $region40: #{tpu_custom_call.1} parent=11 // pred_fallthru
          _
        // Predicated region
        $region41: #{tpu_custom_call.1} parent=11 // pred_check
          %p274 = pneg %p212
        $region42: #{tpu_custom_call.1} parent=11 // pred_check_branch
          %276 = sbr.rel (%p274) target = $region44
        $region43: #{tpu_custom_call.1} parent=11 // pred_region
          _
        $region44: #{tpu_custom_call.1} parent=11 // pred_fallthru
          _
      $region12: #{tpu_custom_call.1} parent=5 // pred_fallthru
        _
      %p277 = scmp.lt.s32.totalorder %s18, 2
      // Predicated region
      $region45: #{tpu_custom_call.1} parent=5 // pred_check
        %p278 = pneg %p277
      $region46: #{tpu_custom_call.1} parent=5 // pred_check_branch
        %280 = sbr.rel (%p278) target = $region48
      $region47: #{tpu_custom_call.1} parent=5 // pred_region
        // Predicated region
        $region49: #{tpu_custom_call.1} parent=47 // pred_check
          %p281 = pneg %p38
        $region50: #{tpu_custom_call.1} parent=47 // pred_check_branch
          %283 = sbr.rel (%p281) target = $region52
        $region51: #{tpu_custom_call.1} parent=47 // pred_region
          %p284 = scmp.lt.s32.totalorder %s18, 1
          %s285 = scalar_select %p284, %s18, 1
          %s286 = smul.addr %s285, 8
          %s287 = scalar_lea.vmem %s0, %s286
        $region52: #{tpu_custom_call.1} parent=47 // pred_fallthru
          _
      $region48: #{tpu_custom_call.1} parent=5 // pred_fallthru
        _
      %p288 = scmp.le.s32.totalorder 1, %s18
      %p289 = scmp.lt.s32.totalorder %s18, 3
      %p290 = pnand %p288, %p289
      %p291 = pneg %p290
      // Predicated region
      $region53: #{tpu_custom_call.1} parent=5 // pred_check
        _
      $region54: #{tpu_custom_call.1} parent=5 // pred_check_branch
        %293 = sbr.rel (%p290) target = $region56
      $region55: #{tpu_custom_call.1} parent=5 // pred_region
        %s294 = ssub.s32 %s18, 1
        %p295 = scmp.lt.s32.totalorder %s23, 1
        %s296 = scalar_select %p295, %s23, 1
        %s297 = smul.addr %s296, 8
        %s298 = scalar_lea.vmem %s0, %s297
        %p299 = pneg %p44
        %p300 = pneg %p41
        %p301 = pneg %p65
        %p302 = pneg %p62
        %p303 = pneg %p86
        %p304 = pneg %p83
        %p305 = pneg %p107
        %p306 = pneg %p104
        %p307 = pneg %p128
        %p308 = pneg %p125
        %p309 = pneg %p149
        %p310 = pneg %p146
        %p311 = pneg %p170
        %p312 = pneg %p167
        %p313 = pneg %p191
        %p314 = pneg %p188
        %p315 = pneg %p212
        %p316 = pneg %p209
        %p317 = pneg %p238
        %p318 = pneg %p235
        %s319 = sand.u32 %s225, 1
        %s320 = scalar_lea.sflag [#allocation3], %s319
        %s321 = sand.u32 %s225, 1
        %s322 = smul.addr %s321, 8
        %s323 = scalar_lea.vmem [#allocation2], %s322
        %p324 = scmp.lt.s32.totalorder %s23, 1
        %s325 = scalar_select %p324, %s23, 1
        %s326 = smul.addr %s325, 8
        %s327 = scalar_lea.vmem %s0, %s326
        %v329 = vlaneseq
        %v330 = vand.u32 %v329, 127
        %v331 = vmul.u32 %v330, 2
        %vm332 = vcmp.ge.s32.totalorder %v331, 0
        %vm333 = vcmp.lt.s32.totalorder %v331, 16
        %vm334 = vmand %vm332, %vm333
        %v335 = vadd.s32 %v331, 1
        %vm336 = vcmp.ge.s32.totalorder %v335, 0
        %vm337 = vcmp.lt.s32.totalorder %v335, 16
        %vm338 = vmand %vm336, %vm337
        %v339 = vld [vmem:[%s327] sm:$0xff]
        %vm340 = vcmask 68608
        %v341 = vsel %vm340, %v339, 0.0
        %v342 = vrot.slane %v341, 4
        %v343 = vadd.f32 %v341, %v342
        %v344 = vrot.slane %v343, 2
        %v345 = vadd.f32 %v343, %v344
        %v346 = vrot.slane %v345, 1
        %v347 = vadd.f32 %v345, %v346
        %v348 = vrcp.pop 4.0
        %v349 = vmul.f32 %v347, %v348
        %v350 = vsub.f32 %v339, %v349
        %v351 = vmul.f32 %v350, %v350
        %v352 = vsel %vm340, %v351, 0.0
        %v353 = vrot.slane %v352, 4
        %v354 = vadd.f32 %v352, %v353
        %v355 = vrot.slane %v354, 2
        %v356 = vadd.f32 %v354, %v355
        %v357 = vrot.slane %v356, 1
        %v358 = vadd.f32 %v356, %v357
        %v359 = vmul.f32 %v358, %v348
        %v360 = vadd.f32 %v359, 1e-05
        %v361 = vrsqrt.pop %v360
        %v362 = vmul.f32 %v350, %v361
        %v363 = vld [vmem:[%s5] sm:$0xf]
        %365 = vset.pattern.permute.xlu0 0
        %366 = vperm.xlu0 %365, %v363
        %v367 = vpop.permute.xlu0 %366
        %v369 = vmul.f32 %v362, %v367
        %v370 = vld [vmem:[%s6] sm:$0xf]
        %372 = vset.pattern.permute.xlu0 0
        %373 = vperm.xlu0 %372, %v370
        %v374 = vpop.permute.xlu0 %373
        %v376 = vadd.f32 %v369, %v374
        %v377 = vsel %vm334, %v376, 0.0
        %v378 = vmax.f32 %v377, 0.0
        %v380 = vrot.slane %v339, 4
        %v382 = vsel %vm340, %v380, 0.0
        %v383 = vrot.slane %v382, 4
        %v384 = vadd.f32 %v382, %v383
        %v385 = vrot.slane %v384, 2
        %v386 = vadd.f32 %v384, %v385
        %v387 = vrot.slane %v386, 1
        %v388 = vadd.f32 %v386, %v387
        %v389 = vmul.f32 %v388, %v348
        %v390 = vsub.f32 %v339, %v389
        %v391 = vmul.f32 %v390, %v390
        %v393 = vrot.slane %v391, 4
        %v395 = vsel %vm340, %v393, 0.0
        %v396 = vrot.slane %v395, 4
        %v397 = vadd.f32 %v395, %v396
        %v398 = vrot.slane %v397, 2
        %v399 = vadd.f32 %v397, %v398
        %v400 = vrot.slane %v399, 1
        %v401 = vadd.f32 %v399, %v400
        %v402 = vmul.f32 %v401, %v348
        %v403 = vadd.f32 %v402, 1e-05
        %v404 = vrsqrt.pop %v403
        %v405 = vmul.f32 %v390, %v404
        %v406 = vrot.slane %v367, 4
        %v408 = vmul.f32 %v405, %v406
        %v409 = vrot.slane %v374, 4
        %v411 = vadd.f32 %v408, %v409
        %v412 = vsel %vm338, %v411, 0.0
        %v413 = vmax.f32 %v412, 0.0
        %415 = vrot.lane.b32.xlu0 %v378, 127
        %v416 = vpop.permute.xlu0 %415
        %vm418 = vcmask 1043456
        %v419 = vsel %vm418, %v378, %v413
        %v420 = vld [vmem:[%s1] sm:$0xf]
        %v421 = vpack.c.bf16 %v416, %v419
        %v422 = vld [vmem:[%s2] sm:$0xff]
        %424 = vset.pattern.permute.xlu0 0
        %425 = vperm.xlu0 %424, %v422
        %v426 = vpop.permute.xlu0 %425
        %vm428 = vcmask 97280
        %v430 = vsel %vm428, %v420, 0
        %vm432 = vcmask 1045504
        %v434 = vsel %vm432, %v421, 0
        %436 = vmatprep.subr.bf16.mxu0 0
        %437 = vmatpush1.bf16.msra.mxu0 %v434
        %438 = vmatprep.subr.bf16.mxu0 0
        %439 = vmatpush1.bf16.msra.mxu0 0
        %440 = vmatprep.subr.bf16.mxu0 0
        %441 = vmatpush1.bf16.msra.mxu0 0
        %442 = vmatprep.subr.bf16.mxu0 0
        %443 = vmatpush1.bf16.msra.mxu0 0
        %444 = vmatprep.subr.bf16.mxu0 0
        %445 = vmatpush1.bf16.msra.mxu0 0
        %446 = vmatprep.subr.bf16.mxu0 0
        %447 = vmatpush1.bf16.msra.mxu0 0
        %448 = vmatprep.subr.bf16.mxu0 0
        %449 = vmatpush1.bf16.msra.mxu0 0
        %450 = vmatprep.subr.bf16.mxu0 0
        %451 = vmatpush1.bf16.msra.mxu0 0
        %452 = vmatprep.subr.bf16.mxu0 0
        %453 = vmatpush1.bf16.msra.mxu0 0
        %454 = vmatprep.subr.bf16.mxu0 0
        %455 = vmatpush1.bf16.msra.mxu0 0
        %456 = vmatprep.subr.bf16.mxu0 0
        %457 = vmatpush1.bf16.msra.mxu0 0
        %458 = vmatprep.subr.bf16.mxu0 0
        %459 = vmatpush1.bf16.msra.mxu0 0
        %460 = vmatprep.subr.bf16.mxu0 0
        %461 = vmatpush1.bf16.msra.mxu0 0
        %462 = vmatprep.subr.bf16.mxu0 0
        %463 = vmatpush1.bf16.msra.mxu0 0
        %464 = vmatprep.subr.bf16.mxu0 0
        %465 = vmatpush1.bf16.msra.mxu0 0
        %466 = vmatprep.subr.bf16.mxu0 0
        %467 = vmatpush1.bf16.msra.mxu0 0
        %468 = vmatprep.mubr.bf16.mxu0 0
        %469 = vmatmul.mubr.bf16.gmra.mrb[0].mxu0 %v430
        %v470 = vpop.f32.mrb[0].mxu0
        %v471 = vadd.f32 %v426, %v470
        %v472 = vpop.f32.mrb[0].mxu0
        %v473 = vpop.f32.mrb[0].mxu0
        %v474 = vpop.f32.mrb[0].mxu0
        %475 = vdwg.mxu0
        %vm476 = vcmask 64512
        %v477 = vsel %vm476, %v471, 0.0
        %v478 = vrot.slane %v477, 4
        %v479 = vadd.f32 %v477, %v478
        %v480 = vrot.slane %v479, 2
        %v481 = vadd.f32 %v479, %v480
        %v482 = vrot.slane %v481, 1
        %v483 = vadd.f32 %v481, %v482
        %v484 = vrcp.pop 8.0
        %v485 = vmul.f32 %v483, %v484
        %v486 = vsub.f32 %v471, %v485
        %v487 = vmul.f32 %v486, %v486
        %v488 = vsel %vm476, %v487, 0.0
        %v489 = vrot.slane %v488, 4
        %v490 = vadd.f32 %v488, %v489
        %v491 = vrot.slane %v490, 2
        %v492 = vadd.f32 %v490, %v491
        %v493 = vrot.slane %v492, 1
        %v494 = vadd.f32 %v492, %v493
        %v495 = vmul.f32 %v494, %v484
        %v496 = vadd.f32 %v495, 1e-05
        %v497 = vrsqrt.pop %v496
        %v498 = vmul.f32 %v486, %v497
        %v499 = vld [vmem:[%s7] sm:$0xff]
        %501 = vset.pattern.permute.xlu0 0
        %502 = vperm.xlu0 %501, %v499
        %v503 = vpop.permute.xlu0 %502
        %v505 = vmul.f32 %v498, %v503
        %v506 = vld [vmem:[%s8] sm:$0xff]
        %508 = vset.pattern.permute.xlu0 0
        %509 = vperm.xlu0 %508, %v506
        %v510 = vpop.permute.xlu0 %509
        %v512 = vadd.f32 %v505, %v510
        %v513 = vmax.f32 %v512, 0.0
        %515 = vrot.lane.b32.xlu0 %v513, 1
        %v516 = vpop.permute.xlu0 %515
        %vm518 = vcmask 7168
        %v519 = vsel %vm518, 0.0, %v516
        %vm520 = vcmask 72704
        %v521 = vsel %vm520, %v519, 0.0
        %523 = vrot.lane.b32.xlu0 %v521, 127
        %v524 = vpop.permute.xlu0 %523
        %526 = vrot.lane.b32.xlu0 %v521, 126
        %v527 = vpop.permute.xlu0 %526
        %v529 = vld [vmem:[%s3] sm:$0xf]
        %v530 = vpack.c.bf16 %v524, %v521
        %v531 = vpack.c.bf16 %v527, %v527
        %v532 = vld [vmem:[%s4] sm:$0xff]
        %534 = vset.pattern.permute.xlu0 0
        %535 = vperm.xlu0 %534, %v532
        %v536 = vpop.permute.xlu0 %535
        %vm538 = vcmask 195584
        %v540 = vsel %vm538, %v529, 0
        %v543 = vsel %vm418, %v531, 0
        %545 = vmatprep.subr.bf16.mxu0 0
        %546 = vmatpush1.bf16.msra.mxu0 %v530
        %547 = vmatprep.subr.bf16.mxu0 0
        %548 = vmatpush1.bf16.msra.mxu0 %v543
        %549 = vmatprep.subr.bf16.mxu0 0
        %550 = vmatpush1.bf16.msra.mxu0 0
        %551 = vmatprep.subr.bf16.mxu0 0
        %552 = vmatpush1.bf16.msra.mxu0 0
        %553 = vmatprep.subr.bf16.mxu0 0
        %554 = vmatpush1.bf16.msra.mxu0 0
        %555 = vmatprep.subr.bf16.mxu0 0
        %556 = vmatpush1.bf16.msra.mxu0 0
        %557 = vmatprep.subr.bf16.mxu0 0
        %558 = vmatpush1.bf16.msra.mxu0 0
        %559 = vmatprep.subr.bf16.mxu0 0
        %560 = vmatpush1.bf16.msra.mxu0 0
        %561 = vmatprep.subr.bf16.mxu0 0
        %562 = vmatpush1.bf16.msra.mxu0 0
        %563 = vmatprep.subr.bf16.mxu0 0
        %564 = vmatpush1.bf16.msra.mxu0 0
        %565 = vmatprep.subr.bf16.mxu0 0
        %566 = vmatpush1.bf16.msra.mxu0 0
        %567 = vmatprep.subr.bf16.mxu0 0
        %568 = vmatpush1.bf16.msra.mxu0 0
        %569 = vmatprep.subr.bf16.mxu0 0
        %570 = vmatpush1.bf16.msra.mxu0 0
        %571 = vmatprep.subr.bf16.mxu0 0
        %572 = vmatpush1.bf16.msra.mxu0 0
        %573 = vmatprep.subr.bf16.mxu0 0
        %574 = vmatpush1.bf16.msra.mxu0 0
        %575 = vmatprep.subr.bf16.mxu0 0
        %576 = vmatpush1.bf16.msra.mxu0 0
        %577 = vmatprep.mubr.bf16.mxu0 0
        %578 = vmatmul.mubr.bf16.gmra.mrb[0].mxu0 %v540
        %v579 = vpop.f32.mrb[0].mxu0
        %v580 = vadd.f32 %v536, %v579
        %v581 = vpop.f32.mrb[0].mxu0
        %v582 = vpop.f32.mrb[0].mxu0
        %v583 = vpop.f32.mrb[0].mxu0
        %584 = vdwg.mxu0
        %v585 = vmax.f32 %v339, %v380
        %v587 = vrot.slane %v585, 6
        %vm589 = vcmask 1041408
        %v590 = vsel %vm589, 0.0, %v587
        %v591 = vsel %vm432, %v590, 0.0
        %v592 = vadd.f32 %v580, %v591
        %593 = vst.msk [vmem:[%s323] sm:$0xff] %vm476, %v592
        %s594 = sand.u32 %s225, 1
        %s595 = scalar_lea.sflag [#allocation3], %s594
        %s596 = sand.u32 %s225, 1
        %s597 = smul.addr %s596, 8
        %s598 = scalar_lea.vmem [#allocation2], %s597
        // Predicated region
        $region57: #{tpu_custom_call.1} parent=55 // pred_check
          %p599 = pneg %p235
        $region58: #{tpu_custom_call.1} parent=55 // pred_check_branch
          %601 = sbr.rel (%p599) target = $region60
        $region59: #{tpu_custom_call.1} parent=55 // pred_region
          %s603 = ssub.s32 128, 128
          %604 = vsyncadd %s595, %s603
          %s605 = smul.addr %s23, 128
          %s606 = scalar_lea.hbm %s9, %s605
          %s608 = sshll.u32 %s598, 4
          %s609 = int_to_ptr.vmem [resolvable:$true] %s608
          %611 = dma.vmem_to_hbm [thread:$0]  %s609, 128, %s606, %s595
        $region60: #{tpu_custom_call.1} parent=55 // pred_fallthru
          _
      $region56: #{tpu_custom_call.1} parent=5 // pred_fallthru
        _
      %p612 = scmp.le.s32.totalorder 2, %s18
      // Predicated region
      $region61: #{tpu_custom_call.1} parent=5 // pred_check
        %p613 = pneg %p612
      $region62: #{tpu_custom_call.1} parent=5 // pred_check_branch
        %615 = sbr.rel (%p613) target = $region64
      $region63: #{tpu_custom_call.1} parent=5 // pred_region
        %s616 = ssub.s32 %s18, 2
        // Predicated region
        $region65: #{tpu_custom_call.1} parent=63 // pred_check
          %p617 = pneg %p241
        $region66: #{tpu_custom_call.1} parent=63 // pred_check_branch
          %619 = sbr.rel (%p617) target = $region68
        $region67: #{tpu_custom_call.1} parent=63 // pred_region
          %s620 = sand.u32 %s226, 1
          %s621 = scalar_lea.sflag [#allocation3], %s620
          %s622 = sand.u32 %s226, 1
          %s623 = smul.addr %s622, 8
          %s624 = scalar_lea.vmem [#allocation2], %s623
          %625 = dma.done %s621, 128
        $region68: #{tpu_custom_call.1} parent=63 // pred_fallthru
          _
      $region64: #{tpu_custom_call.1} parent=5 // pred_fallthru
        _
    $region6: #{tpu_custom_call.1} parent=1 // loop_footer
      %s22 = sadd.s32 1, %s18
    $region7: #{tpu_custom_call.1} parent=1 // loop_footer_branch
      %17 = sbr.rel target = $region3
    $region8: #{tpu_custom_call.1} parent=1 // loop_exit
      _
    %626 = vsyncpa [#allocation3], 1
    %s627 = scalar_lea.sflag [#allocation3], 1
    %628 = vsyncpa %s627, 1

</llo_original>
